<compile_context>
chip_gen: v7x
topology: tpu7x:2x2x1
jax: 0.10.0
libtpu: 0.0.40
codegen_flags: <defaults>
</compile_context>

<pallas_src>
import numpy as np
import jax
import jax.numpy as jnp
from jax.experimental import pallas as pl
from jax.experimental.pallas import tpu as pltpu

BN_EPS = 1e-5


# ----------------------------- fused kernel ----------------------------------
def _make_double_conv_kernel(N, H, W, Cin, Cout):
    WCin = W * Cin
    L = W * Cout
    R = N * H
    inv_count = 1.0 / float(N * H * W)

    def shifted_cat(src):
        """(N, H, C) slab -> (N*H, 3C) im2row LHS: [row h-1 | row h | row h+1]
        with zero padding at the H boundaries (W padding is folded into the
        Toeplitz weights)."""
        C = src.shape[-1]
        z = jnp.zeros((N, 1, C), src.dtype)
        up = jnp.concatenate([z, src[:, : H - 1, :]], axis=1)   # input row h-1
        dn = jnp.concatenate([src[:, 1:, :], z], axis=1)        # input row h+1
        return jnp.concatenate([up, src, dn], axis=-1).reshape(R, 3 * C)

    def kernel(x_ref, w1_ref, w2_ref, gb1_ref, gb2_ref, o_ref):
        # x_ref  : (N, H, W*Cin)    f32 input rows, channels flattened onto lanes
        # w1_ref : (3*W*Cin, L)     bf16 block-Toeplitz conv1 weights (ky folded into K)
        # w2_ref : (3*L, L)         bf16 block-Toeplitz conv2 weights
        # gb*_ref: (2, L)           f32 BN gamma (row 0) / beta (row 1), lane-tiled
        # o_ref  : (N*H, L)         f32 lane-dense output slab

        # Channel-averaging matrix, generated in-kernel (no HBM DMA):
        # sel[i, j] = (i % Cout == j % Cout) / (N*H*W)
        row_c = jax.lax.broadcasted_iota(jnp.int32, (L, L), 0) % Cout
        col_c = jax.lax.broadcasted_iota(jnp.int32, (L, L), 1) % Cout
        sel = jnp.where(row_c == col_c, inv_count, 0.0).astype(jnp.float32)

        def bn_relu(y, gb):
            # One (2, L) @ (L, L) matmul produces per-channel mean and E[y^2],
            # replicated into every lane of that channel.
            s1 = jnp.sum(y, axis=0, keepdims=True)
            s2 = jnp.sum(y * y, axis=0, keepdims=True)
            stats = jax.lax.dot_general(
                jnp.concatenate([s1, s2], axis=0), sel,
                (((1,), (0,)), ((), ())),
                preferred_element_type=jnp.float32)              # (2, L)
            mean = stats[0:1, :]
            var = stats[1:2, :] - mean * mean
            scale = gb[0:1, :] * jax.lax.rsqrt(var + BN_EPS)
            shift = gb[1:2, :] - mean * scale
            return jnp.maximum(y * scale + shift, 0.0)

        def conv(src, w_ref):
            # Single K = 3*W*C matmul, bf16 operands, f32 accumulation.
            lhs = shifted_cat(src).astype(jnp.bfloat16)
            return jax.lax.dot_general(lhs, w_ref[...],
                                       (((1,), (0,)), ((), ())),
                                       preferred_element_type=jnp.float32)

        h1 = bn_relu(conv(x_ref[...], w1_ref), gb1_ref[...])     # (R, L) f32
        y2 = conv(h1.reshape(N, H, L), w2_ref)
        o_ref[...] = bn_relu(y2, gb2_ref[...]).astype(o_ref.dtype)

    return kernel


# --------------------------- wrapper / host prep ------------------------------
def _toeplitz_conv_weights(w_hwio, W):
    """(3,3,Ci,Co) conv kernel -> (3*W*Ci, W*Co) block-Toeplitz matrix.

    M[ky*W*Ci + win*Ci + ci, w*Co + co] = w_hwio[ky, kx, ci, co] with win = w+kx-1;
    taps falling outside [0, W) are dropped, which is exactly zero padding along W.
    """
    _, _, Ci, Co = w_hwio.shape
    place = np.zeros((3, W, W), np.float32)          # place[kx, w_in, w_out]
    for kx in range(3):
        for w in range(W):
            win = w + kx - 1
            if 0 <= win < W:
                place[kx, win, w] = 1.0
    m = jnp.einsum('xvw,yxio->yviwo', jnp.asarray(place),
                   w_hwio.astype(jnp.float32))       # (3, W, Ci, W, Co)
    return m.reshape(3 * W * Ci, W * Co)


@jax.jit
def inconv_forward(x_nchw, w1, b1, g1, be1, w2, b2, g2, be2):
    """double_conv forward.  Conv biases b1/b2 are accepted for interface parity
    but unused: a per-channel constant before training-mode BN is exactly
    cancelled by the mean subtraction."""
    del b1, b2
    N, Cin, H, W = x_nchw.shape
    Cout = w1.shape[-1]
    WCin = W * Cin
    L = W * Cout
    R = N * H

    # NCHW -> lane-dense (N, H, W*Cin) rows.  (x is tiny; kept f32 so the in-kernel
    # sublane shifts stay on the well-trodden f32 path; the matmul LHS is cast to
    # bf16 inside the kernel.)
    x = jnp.transpose(x_nchw, (0, 2, 3, 1)).reshape(N, H, WCin).astype(jnp.float32)

    m1 = _toeplitz_conv_weights(w1, W).astype(jnp.bfloat16)      # (3*W*Cin, L)
    m2 = _toeplitz_conv_weights(w2, W).astype(jnp.bfloat16)      # (3*L,     L)

    def tile_gb(g, b):                               # -> (2, W*Cout) f32
        return jnp.stack([jnp.tile(g.astype(jnp.float32), W),
                          jnp.tile(b.astype(jnp.float32), W)], axis=0)

    kernel = _make_double_conv_kernel(N, H, W, Cin, Cout)

    out2d = pl.pallas_call(
        kernel,
        out_shape=jax.ShapeDtypeStruct((R, L), jnp.float32),
        grid=(1,),
        in_specs=[
            pl.BlockSpec((N, H, WCin), lambda i: (0, 0, 0)),
            pl.BlockSpec((3 * WCin, L), lambda i: (0, 0)),
            pl.BlockSpec((3 * L, L), lambda i: (0, 0)),
            pl.BlockSpec((2, L), lambda i: (0, 0)),
            pl.BlockSpec((2, L), lambda i: (0, 0)),
        ],
        out_specs=pl.BlockSpec((R, L), lambda i: (0, 0)),
        compiler_params=pltpu.CompilerParams(
            dimension_semantics=("arbitrary",)),
    )(x, m1, m2, tile_gb(g1, be1), tile_gb(g2, be2))

    # (N*H, W*Cout) slab -> NCHW
    return jnp.transpose(out2d.reshape(N, H, W, Cout), (0, 3, 1, 2))


# ------------------------------ pure-JAX reference ----------------------------
def _ref_forward(x_nchw, w1, b1, g1, be1, w2, b2, g2, be2):
    def conv(x, w, b):  # NHWC, HWIO (with bias, unlike the kernel)
        y = jax.lax.conv_general_dilated(
            x, w, window_strides=(1, 1), padding="SAME",
            dimension_numbers=("NHWC", "HWIO", "NHWC"))
        return y + b.reshape(1, 1, 1, -1)

    def bn_relu(x, g, b):
        mean = jnp.mean(x, axis=(0, 1, 2), keepdims=True)
        var = jnp.mean((x - mean) ** 2, axis=(0, 1, 2), keepdims=True)
        y = (x - mean) * jax.lax.rsqrt(var + BN_EPS) * g.reshape(1, 1, 1, -1) \
            + b.reshape(1, 1, 1, -1)
        return jnp.maximum(y, 0.0)

    x = jnp.transpose(x_nchw, (0, 2, 3, 1))
    x = bn_relu(conv(x, w1, b1), g1, be1)
    x = bn_relu(conv(x, w2, b2), g2, be2)
    return jnp.transpose(x, (0, 3, 1, 2))


if __name__ == "__main__":
    N, Cin, H, W, Cout = 2, 4, 16, 16, 8

    key = jax.random.PRNGKey(0)
    kx, k1, k2, k3, k4 = jax.random.split(key, 5)
    x = jax.random.normal(kx, (N, Cin, H, W), jnp.float32)

    # synthetic parameters (conv weights stored HWIO; PyTorch default BN affine)
    w1 = jax.random.normal(k1, (3, 3, Cin, Cout), jnp.float32) * 0.1
    b1 = jax.random.normal(k2, (Cout,), jnp.float32) * 0.1
    w2 = jax.random.normal(k3, (3, 3, Cout, Cout), jnp.float32) * 0.1
    b2 = jax.random.normal(k4, (Cout,), jnp.float32) * 0.1
    g1 = jnp.ones((Cout,), jnp.float32)
    be1 = jnp.zeros((Cout,), jnp.float32)
    g2 = jnp.ones((Cout,), jnp.float32)
    be2 = jnp.zeros((Cout,), jnp.float32)

    out = inconv_forward(x, w1, b1, g1, be1, w2, b2, g2, be2)
    out = jax.block_until_ready(out)

    ref = _ref_forward(x, w1, b1, g1, be1, w2, b2, g2, be2)
    assert out.shape == (N, Cout, H, W)
    # Tolerance relaxed vs the f32-only version: MXU operands are bf16 (f32 accum),
    # and BN outputs are unit-scale, so a few 1e-2 absolute error is expected.
    assert jnp.allclose(out, ref, atol=5e-2, rtol=5e-2), "mismatch vs JAX reference"

    print("KERNEL_OK")
</pallas_src>

<mosaic_0001>
module attributes {stable_mosaic.version = 11 : i64} {
  func.func @kernel(%arg0: i32, %arg1: memref<2x16x64xf32, #tpu.memory_space<vmem>>, %arg2: memref<192x128xbf16, #tpu.memory_space<vmem>>, %arg3: memref<384x128xbf16, #tpu.memory_space<vmem>>, %arg4: memref<2x128xf32, #tpu.memory_space<vmem>>, %arg5: memref<2x128xf32, #tpu.memory_space<vmem>>, %arg6: memref<32x128xf32, #tpu.memory_space<vmem>>) attributes {dimension_semantics = [#tpu.dimension_semantics<arbitrary>], iteration_bounds = array<i64: 1>, scalar_prefetch = 0 : i64, scratch_operands = 0 : i64, tpu.core_type = #tpu.core_type<tc>, window_params = [{pipeline_mode = #tpu.pipeline_mode<synchronous>, transform_indices = @transform_0, window_bounds = array<i64: 2, 16, 64>}, {pipeline_mode = #tpu.pipeline_mode<synchronous>, transform_indices = @transform_1, window_bounds = array<i64: 192, 128>}, {pipeline_mode = #tpu.pipeline_mode<synchronous>, transform_indices = @transform_2, window_bounds = array<i64: 384, 128>}, {pipeline_mode = #tpu.pipeline_mode<synchronous>, transform_indices = @transform_3, window_bounds = array<i64: 2, 128>}, {pipeline_mode = #tpu.pipeline_mode<synchronous>, transform_indices = @transform_4, window_bounds = array<i64: 2, 128>}, {pipeline_mode = #tpu.pipeline_mode<synchronous>, transform_indices = @transform_5, window_bounds = array<i64: 32, 128>}]} {
    %0 = tpu.iota {dimensions = array<i32: 0>} : vector<128x128xi32>
    %c8_i32 = arith.constant 8 : i32
    %c0_i32 = arith.constant 0 : i32
    %1 = arith.cmpi eq, %c8_i32, %c0_i32 : i32
    %c1_i32 = arith.constant 1 : i32
    %2 = arith.select %1, %c1_i32, %c8_i32 : i32
    %3 = vector.broadcast %2 : i32 to vector<128x128xi32>
    %4 = arith.remsi %0, %3 : vector<128x128xi32>
    %c0_i32_0 = arith.constant 0 : i32
    %5 = vector.broadcast %c0_i32_0 : i32 to vector<128x128xi32>
    %6 = arith.cmpi ne, %4, %5 : vector<128x128xi32>
    %c0_i32_1 = arith.constant 0 : i32
    %7 = vector.broadcast %c0_i32_1 : i32 to vector<128x128xi32>
    %8 = arith.cmpi slt, %4, %7 : vector<128x128xi32>
    %c0_i32_2 = arith.constant 0 : i32
    %9 = arith.cmpi slt, %2, %c0_i32_2 : i32
    %10 = vector.broadcast %9 : i1 to vector<128x128xi1>
    %11 = vector.broadcast %10 : vector<128x128xi1> to vector<128x128xi1>
    %12 = arith.xori %8, %11 : vector<128x128xi1>
    %13 = arith.andi %12, %6 : vector<128x128xi1>
    %14 = vector.broadcast %2 : i32 to vector<128x128xi32>
    %15 = arith.addi %4, %14 : vector<128x128xi32>
    %16 = arith.select %13, %15, %4 : vector<128x128xi1>, vector<128x128xi32>
    %17 = tpu.iota {dimensions = array<i32: 1>} : vector<128x128xi32>
    %c8_i32_3 = arith.constant 8 : i32
    %c0_i32_4 = arith.constant 0 : i32
    %18 = arith.cmpi eq, %c8_i32_3, %c0_i32_4 : i32
    %c1_i32_5 = arith.constant 1 : i32
    %19 = arith.select %18, %c1_i32_5, %c8_i32_3 : i32
    %20 = vector.broadcast %19 : i32 to vector<128x128xi32>
    %21 = arith.remsi %17, %20 : vector<128x128xi32>
    %c0_i32_6 = arith.constant 0 : i32
    %22 = vector.broadcast %c0_i32_6 : i32 to vector<128x128xi32>
    %23 = arith.cmpi ne, %21, %22 : vector<128x128xi32>
    %c0_i32_7 = arith.constant 0 : i32
    %24 = vector.broadcast %c0_i32_7 : i32 to vector<128x128xi32>
    %25 = arith.cmpi slt, %21, %24 : vector<128x128xi32>
    %c0_i32_8 = arith.constant 0 : i32
    %26 = arith.cmpi slt, %19, %c0_i32_8 : i32
    %27 = vector.broadcast %26 : i1 to vector<128x128xi1>
    %28 = vector.broadcast %27 : vector<128x128xi1> to vector<128x128xi1>
    %29 = arith.xori %25, %28 : vector<128x128xi1>
    %30 = arith.andi %29, %23 : vector<128x128xi1>
    %31 = vector.broadcast %19 : i32 to vector<128x128xi32>
    %32 = arith.addi %21, %31 : vector<128x128xi32>
    %33 = arith.select %30, %32, %21 : vector<128x128xi1>, vector<128x128xi32>
    %34 = arith.cmpi eq, %16, %33 : vector<128x128xi32>
    %cst = arith.constant 0.001953125 : f32
    %cst_9 = arith.constant 0.000000e+00 : f32
    %35 = vector.broadcast %cst : f32 to vector<128x128xf32>
    %36 = vector.broadcast %cst_9 : f32 to vector<128x128xf32>
    %37 = arith.select %34, %35, %36 : vector<128x128xi1>, vector<128x128xf32>
    %c0 = arith.constant 0 : index
    %c0_10 = arith.constant 0 : index
    %c0_11 = arith.constant 0 : index
    %38 = vector.load %arg1[%c0, %c0_10, %c0_11] : memref<2x16x64xf32, #tpu.memory_space<vmem>>, vector<2x16x64xf32>
    %cst_12 = arith.constant 0.000000e+00 : f32
    %39 = vector.broadcast %cst_12 : f32 to vector<2x1x64xf32>
    %40 = vector.extract_strided_slice %38 {offsets = [0, 0, 0], sizes = [2, 15, 64], strides = [1, 1, 1]} : vector<2x16x64xf32> to vector<2x15x64xf32>
    %41 = tpu.concatenate %39, %40 in 1 : vector<2x1x64xf32>, vector<2x15x64xf32> -> vector<2x16x64xf32>
    %42 = vector.extract_strided_slice %38 {offsets = [0, 1, 0], sizes = [2, 15, 64], strides = [1, 1, 1]} : vector<2x16x64xf32> to vector<2x15x64xf32>
    %43 = tpu.concatenate %42, %39 in 1 : vector<2x15x64xf32>, vector<2x1x64xf32> -> vector<2x16x64xf32>
    %44 = tpu.concatenate %41, %38, %43 in 2 : vector<2x16x64xf32>, vector<2x16x64xf32>, vector<2x16x64xf32> -> vector<2x16x192xf32>
    %45 = vector.shape_cast %44 : vector<2x16x192xf32> to vector<32x192xf32>
    %46 = arith.truncf %45 : vector<32x192xf32> to vector<32x192xbf16>
    %c0_13 = arith.constant 0 : index
    %c0_14 = arith.constant 0 : index
    %47 = vector.load %arg2[%c0_13, %c0_14] : memref<192x128xbf16, #tpu.memory_space<vmem>>, vector<192x128xbf16>
    %cst_15 = arith.constant dense<0.000000e+00> : vector<32x128xf32>
    %48 = tpu.matmul %46, %47, %cst_15 {dimension_numbers = #tpu.dot_dimension_numbers<[1], [0], [0], [1], [0, 0, 1, 1], [], []>} : vector<32x192xbf16>, vector<192x128xbf16>, vector<32x128xf32> -> vector<32x128xf32>
    %c0_16 = arith.constant 0 : index
    %c0_17 = arith.constant 0 : index
    %49 = vector.load %arg4[%c0_16, %c0_17] : memref<2x128xf32, #tpu.memory_space<vmem>>, vector<2x128xf32>
    %cst_18 = arith.constant dense<0.000000e+00> : vector<128xf32>
    %50 = vector.multi_reduction <add>, %48, %cst_18 [0] : vector<32x128xf32> to vector<128xf32>
    %51 = vector.shape_cast %50 : vector<128xf32> to vector<1x128xf32>
    %52 = arith.mulf %48, %48 : vector<32x128xf32>
    %cst_19 = arith.constant dense<0.000000e+00> : vector<128xf32>
    %53 = vector.multi_reduction <add>, %52, %cst_19 [0] : vector<32x128xf32> to vector<128xf32>
    %54 = vector.shape_cast %53 : vector<128xf32> to vector<1x128xf32>
    %55 = tpu.concatenate %51, %54 in 0 : vector<1x128xf32>, vector<1x128xf32> -> vector<2x128xf32>
    %cst_20 = arith.constant dense<0.000000e+00> : vector<2x128xf32>
    %56 = tpu.matmul %55, %37, %cst_20 {dimension_numbers = #tpu.dot_dimension_numbers<[1], [0], [0], [1], [0, 0, 1, 1], [], []>} : vector<2x128xf32>, vector<128x128xf32>, vector<2x128xf32> -> vector<2x128xf32>
    %57 = vector.extract_strided_slice %56 {offsets = [0, 0], sizes = [1, 128], strides = [1, 1]} : vector<2x128xf32> to vector<1x128xf32>
    %58 = vector.extract_strided_slice %56 {offsets = [1, 0], sizes = [1, 128], strides = [1, 1]} : vector<2x128xf32> to vector<1x128xf32>
    %59 = arith.mulf %57, %57 : vector<1x128xf32>
    %60 = arith.subf %58, %59 : vector<1x128xf32>
    %61 = vector.extract_strided_slice %49 {offsets = [0, 0], sizes = [1, 128], strides = [1, 1]} : vector<2x128xf32> to vector<1x128xf32>
    %cst_21 = arith.constant 9.99999974E-6 : f32
    %62 = vector.broadcast %cst_21 : f32 to vector<1x128xf32>
    %63 = arith.addf %60, %62 : vector<1x128xf32>
    %64 = math.rsqrt %63 : vector<1x128xf32>
    %65 = arith.mulf %61, %64 : vector<1x128xf32>
    %66 = vector.extract_strided_slice %49 {offsets = [1, 0], sizes = [1, 128], strides = [1, 1]} : vector<2x128xf32> to vector<1x128xf32>
    %67 = arith.mulf %57, %65 : vector<1x128xf32>
    %68 = arith.subf %66, %67 : vector<1x128xf32>
    %69 = vector.broadcast %65 : vector<1x128xf32> to vector<32x128xf32>
    %70 = arith.mulf %48, %69 : vector<32x128xf32>
    %71 = vector.broadcast %68 : vector<1x128xf32> to vector<32x128xf32>
    %72 = arith.addf %70, %71 : vector<32x128xf32>
    %cst_22 = arith.constant 0.000000e+00 : f32
    %73 = vector.broadcast %cst_22 : f32 to vector<32x128xf32>
    %74 = arith.maximumf %72, %73 : vector<32x128xf32>
    %75 = vector.shape_cast %74 : vector<32x128xf32> to vector<2x16x128xf32>
    %cst_23 = arith.constant 0.000000e+00 : f32
    %76 = vector.broadcast %cst_23 : f32 to vector<2x1x128xf32>
    %77 = vector.extract_strided_slice %75 {offsets = [0, 0, 0], sizes = [2, 15, 128], strides = [1, 1, 1]} : vector<2x16x128xf32> to vector<2x15x128xf32>
    %78 = tpu.concatenate %76, %77 in 1 : vector<2x1x128xf32>, vector<2x15x128xf32> -> vector<2x16x128xf32>
    %79 = vector.extract_strided_slice %75 {offsets = [0, 1, 0], sizes = [2, 15, 128], strides = [1, 1, 1]} : vector<2x16x128xf32> to vector<2x15x128xf32>
    %80 = tpu.concatenate %79, %76 in 1 : vector<2x15x128xf32>, vector<2x1x128xf32> -> vector<2x16x128xf32>
    %81 = tpu.concatenate %78, %75, %80 in 2 : vector<2x16x128xf32>, vector<2x16x128xf32>, vector<2x16x128xf32> -> vector<2x16x384xf32>
    %82 = vector.shape_cast %81 : vector<2x16x384xf32> to vector<32x384xf32>
    %83 = arith.truncf %82 : vector<32x384xf32> to vector<32x384xbf16>
    %c0_24 = arith.constant 0 : index
    %c0_25 = arith.constant 0 : index
    %84 = vector.load %arg3[%c0_24, %c0_25] : memref<384x128xbf16, #tpu.memory_space<vmem>>, vector<384x128xbf16>
    %cst_26 = arith.constant dense<0.000000e+00> : vector<32x128xf32>
    %85 = tpu.matmul %83, %84, %cst_26 {dimension_numbers = #tpu.dot_dimension_numbers<[1], [0], [0], [1], [0, 0, 1, 1], [], []>} : vector<32x384xbf16>, vector<384x128xbf16>, vector<32x128xf32> -> vector<32x128xf32>
    %c0_27 = arith.constant 0 : index
    %c0_28 = arith.constant 0 : index
    %86 = vector.load %arg5[%c0_27, %c0_28] : memref<2x128xf32, #tpu.memory_space<vmem>>, vector<2x128xf32>
    %cst_29 = arith.constant dense<0.000000e+00> : vector<128xf32>
    %87 = vector.multi_reduction <add>, %85, %cst_29 [0] : vector<32x128xf32> to vector<128xf32>
    %88 = vector.shape_cast %87 : vector<128xf32> to vector<1x128xf32>
    %89 = arith.mulf %85, %85 : vector<32x128xf32>
    %cst_30 = arith.constant dense<0.000000e+00> : vector<128xf32>
    %90 = vector.multi_reduction <add>, %89, %cst_30 [0] : vector<32x128xf32> to vector<128xf32>
    %91 = vector.shape_cast %90 : vector<128xf32> to vector<1x128xf32>
    %92 = tpu.concatenate %88, %91 in 0 : vector<1x128xf32>, vector<1x128xf32> -> vector<2x128xf32>
    %cst_31 = arith.constant dense<0.000000e+00> : vector<2x128xf32>
    %93 = tpu.matmul %92, %37, %cst_31 {dimension_numbers = #tpu.dot_dimension_numbers<[1], [0], [0], [1], [0, 0, 1, 1], [], []>} : vector<2x128xf32>, vector<128x128xf32>, vector<2x128xf32> -> vector<2x128xf32>
    %94 = vector.extract_strided_slice %93 {offsets = [0, 0], sizes = [1, 128], strides = [1, 1]} : vector<2x128xf32> to vector<1x128xf32>
    %95 = vector.extract_strided_slice %93 {offsets = [1, 0], sizes = [1, 128], strides = [1, 1]} : vector<2x128xf32> to vector<1x128xf32>
    %96 = arith.mulf %94, %94 : vector<1x128xf32>
    %97 = arith.subf %95, %96 : vector<1x128xf32>
    %98 = vector.extract_strided_slice %86 {offsets = [0, 0], sizes = [1, 128], strides = [1, 1]} : vector<2x128xf32> to vector<1x128xf32>
    %cst_32 = arith.constant 9.99999974E-6 : f32
    %99 = vector.broadcast %cst_32 : f32 to vector<1x128xf32>
    %100 = arith.addf %97, %99 : vector<1x128xf32>
    %101 = math.rsqrt %100 : vector<1x128xf32>
    %102 = arith.mulf %98, %101 : vector<1x128xf32>
    %103 = vector.extract_strided_slice %86 {offsets = [1, 0], sizes = [1, 128], strides = [1, 1]} : vector<2x128xf32> to vector<1x128xf32>
    %104 = arith.mulf %94, %102 : vector<1x128xf32>
    %105 = arith.subf %103, %104 : vector<1x128xf32>
    %106 = vector.broadcast %102 : vector<1x128xf32> to vector<32x128xf32>
    %107 = arith.mulf %85, %106 : vector<32x128xf32>
    %108 = vector.broadcast %105 : vector<1x128xf32> to vector<32x128xf32>
    %109 = arith.addf %107, %108 : vector<32x128xf32>
    %cst_33 = arith.constant 0.000000e+00 : f32
    %110 = vector.broadcast %cst_33 : f32 to vector<32x128xf32>
    %111 = arith.maximumf %109, %110 : vector<32x128xf32>
    %c0_34 = arith.constant 0 : index
    %c0_35 = arith.constant 0 : index
    %112 = vector.load %arg6[%c0_34, %c0_35] : memref<32x128xf32, #tpu.memory_space<vmem>>, vector<32x128xf32>
    tpu.vector_store %arg6[%c0_34, %c0_35], %111 {strides = array<i32>} : memref<32x128xf32, #tpu.memory_space<vmem>>, vector<32x128xf32>,
    return
  }
  func.func @transform_0(%arg0: i32) -> (i32, i32, i32) {
    %c0_i32 = arith.constant 0 : i32
    %c0_i32_0 = arith.constant 0 : i32
    %c0_i32_1 = arith.constant 0 : i32
    %c0_i32_2 = arith.constant 0 : i32
    return %c0_i32, %c0_i32_0, %c0_i32_1 : i32, i32, i32
  }
  func.func @transform_1(%arg0: i32) -> (i32, i32) {
    %c0_i32 = arith.constant 0 : i32
    %c0_i32_0 = arith.constant 0 : i32
    %c0_i32_1 = arith.constant 0 : i32
    return %c0_i32, %c0_i32_0 : i32, i32
  }
  func.func @transform_2(%arg0: i32) -> (i32, i32) {
    %c0_i32 = arith.constant 0 : i32
    %c0_i32_0 = arith.constant 0 : i32
    %c0_i32_1 = arith.constant 0 : i32
    return %c0_i32, %c0_i32_0 : i32, i32
  }
  func.func @transform_3(%arg0: i32) -> (i32, i32) {
    %c0_i32 = arith.constant 0 : i32
    %c0_i32_0 = arith.constant 0 : i32
    %c0_i32_1 = arith.constant 0 : i32
    return %c0_i32, %c0_i32_0 : i32, i32
  }
  func.func @transform_4(%arg0: i32) -> (i32, i32) {
    %c0_i32 = arith.constant 0 : i32
    %c0_i32_0 = arith.constant 0 : i32
    %c0_i32_1 = arith.constant 0 : i32
    return %c0_i32, %c0_i32_0 : i32, i32
  }
  func.func @transform_5(%arg0: i32) -> (i32, i32) {
    %c0_i32 = arith.constant 0 : i32
    %c0_i32_0 = arith.constant 0 : i32
    %c0_i32_1 = arith.constant 0 : i32
    return %c0_i32, %c0_i32_0 : i32, i32
  }
}

</mosaic_0001>

<llo_original>
// kernel: tile.23
$region0: #{tile.23}
  #allocation2 [shape = 's32[1]{0}', space=sflag, size = 0x4, scoped, tag = 'scoped memory for tile.23']
  %s0 = inlined_call_operand.hbm [shape: f32[8], index: 0, kind: input, shape index: {}]
  %s1 = inlined_call_operand.vmem [shape: f32[16,8], index: 1, kind: output, shape index: {}]
  $region1: #{tile.23} parent=0
    #allocation0 [shape = 'u8[512]{0}', space=vmem, size = 0x400, scoped, tag = 'operand span for operand 0']
    #allocation1 [shape = 's32[1]{0}', space=sflag, size = 0x4, scoped, tag = 'scoped memory for tile.23']
    %2 = vsyncpa [#allocation1], 0
    // Predicated region
    $region2: #{tile.23} parent=1 // pred_check
      _
    $region3: #{tile.23} parent=1 // pred_check_branch
      %4 = sbr.rel (0) target = $region5
    $region4: #{tile.23} parent=1 // pred_region
      %s6 = ssub.s32 16, 16
      %7 = vsyncadd [#allocation1], %s6
      %s9 = sshll.u32 [#allocation0], 4
      %s10 = int_to_ptr.vmem [resolvable:$true] %s9
      %12 = dma.hbm_to_vmem [thread:$0]  %s0, 16, %s10, [#allocation1]
    $region5: #{tile.23} parent=1 // pred_fallthru
      _
    // Predicated region
    $region6: #{tile.23} parent=1 // pred_check
      _
    $region7: #{tile.23} parent=1 // pred_check_branch
      %14 = sbr.rel (0) target = $region9
    $region8: #{tile.23} parent=1 // pred_region
      %15 = dma.done [#allocation1], 16
    $region9: #{tile.23} parent=1 // pred_fallthru
      _
    %v16 = vld [vmem:[#allocation0] ss:$0 sm:$0xff]
    %17 = vst [vmem:[%s1] sm:$0xff] %v16
    %s18 = scalar_lea.vmem %s1, 8
    %19 = vst [vmem:[%s18] sm:$0xff] %v16
    %20 = vsyncpa [#allocation1], 1

// kernel: tile.28
$region0: #{tile.28}
  %s0 = inlined_call_operand.vmem [shape: f32[16,8], index: 0, kind: input, shape index: {}]
  %s1 = inlined_call_operand.vmem [shape: f32[1,128], index: 1, kind: output, shape index: {}]
  $region1: #{tile.28} parent=0
    #allocation0 [shape = 'u8[4096]{0}', space=vmem, size = 0x1000, scoped, tag = 'scoped mem for output reshape']
    %v2 = vld [vmem:[%s0] sm:$0x1]
    %vm3 = vcmask 64512
    %4 = vst.msk [vmem:[#allocation0] sm:$0x1] %vm3, %v2
    %s5 = scalar_lea.vmem %s0, 15
    %v6 = vld [vmem:[%s5] sm:$0x1]
    %7 = vrot.lane.b32.xlu0 %v6, 120
    %v8 = vpop.permute.xlu0 %7
    %vm9 = vcmask 1048512
    %10 = vst.msk [vmem:[#allocation0] sm:$0x1] %vm9, %v8
    %s11 = scalar_lea.vmem %s0, 14
    %v12 = vld [vmem:[%s11] sm:$0x1]
    %13 = vrot.lane.b32.xlu0 %v12, 112
    %v14 = vpop.permute.xlu0 %13
    %vm15 = vcmask 982912
    %16 = vst.msk [vmem:[#allocation0] sm:$0x1] %vm15, %v14
    %s17 = scalar_lea.vmem %s0, 13
    %v18 = vld [vmem:[%s17] sm:$0x1]
    %19 = vrot.lane.b32.xlu0 %v18, 104
    %v20 = vpop.permute.xlu0 %19
    %vm21 = vcmask 917312
    %22 = vst.msk [vmem:[#allocation0] sm:$0x1] %vm21, %v20
    %s23 = scalar_lea.vmem %s0, 12
    %v24 = vld [vmem:[%s23] sm:$0x1]
    %25 = vrot.lane.b32.xlu0 %v24, 96
    %v26 = vpop.permute.xlu0 %25
    %vm27 = vcmask 851712
    %28 = vst.msk [vmem:[#allocation0] sm:$0x1] %vm27, %v26
    %s29 = scalar_lea.vmem %s0, 11
    %v30 = vld [vmem:[%s29] sm:$0x1]
    %31 = vrot.lane.b32.xlu0 %v30, 88
    %v32 = vpop.permute.xlu0 %31
    %vm33 = vcmask 786112
    %34 = vst.msk [vmem:[#allocation0] sm:$0x1] %vm33, %v32
    %s35 = scalar_lea.vmem %s0, 10
    %v36 = vld [vmem:[%s35] sm:$0x1]
    %37 = vrot.lane.b32.xlu0 %v36, 80
    %v38 = vpop.permute.xlu0 %37
    %vm39 = vcmask 720512
    %40 = vst.msk [vmem:[#allocation0] sm:$0x1] %vm39, %v38
    %s41 = scalar_lea.vmem %s0, 9
    %v42 = vld [vmem:[%s41] sm:$0x1]
    %43 = vrot.lane.b32.xlu0 %v42, 72
    %v44 = vpop.permute.xlu0 %43
    %vm45 = vcmask 654912
    %46 = vst.msk [vmem:[#allocation0] sm:$0x1] %vm45, %v44
    %s47 = scalar_lea.vmem %s0, 8
    %v48 = vld [vmem:[%s47] sm:$0x1]
    %49 = vrot.lane.b32.xlu0 %v48, 64
    %v50 = vpop.permute.xlu0 %49
    %vm51 = vcmask 589312
    %52 = vst.msk [vmem:[#allocation0] sm:$0x1] %vm51, %v50
    %s53 = scalar_lea.vmem %s0, 7
    %v54 = vld [vmem:[%s53] sm:$0x1]
    %55 = vrot.lane.b32.xlu0 %v54, 56
    %v56 = vpop.permute.xlu0 %55
    %vm57 = vcmask 523712
    %58 = vst.msk [vmem:[#allocation0] sm:$0x1] %vm57, %v56
    %s59 = scalar_lea.vmem %s0, 6
    %v60 = vld [vmem:[%s59] sm:$0x1]
    %61 = vrot.lane.b32.xlu0 %v60, 48
    %v62 = vpop.permute.xlu0 %61
    %vm63 = vcmask 458112
    %64 = vst.msk [vmem:[#allocation0] sm:$0x1] %vm63, %v62
    %s65 = scalar_lea.vmem %s0, 5
    %v66 = vld [vmem:[%s65] sm:$0x1]
    %67 = vrot.lane.b32.xlu0 %v66, 40
    %v68 = vpop.permute.xlu0 %67
    %vm69 = vcmask 392512
    %70 = vst.msk [vmem:[#allocation0] sm:$0x1] %vm69, %v68
    %s71 = scalar_lea.vmem %s0, 4
    %v72 = vld [vmem:[%s71] sm:$0x1]
    %73 = vrot.lane.b32.xlu0 %v72, 32
    %v74 = vpop.permute.xlu0 %73
    %vm75 = vcmask 326912
    %76 = vst.msk [vmem:[#allocation0] sm:$0x1] %vm75, %v74
    %s77 = scalar_lea.vmem %s0, 3
    %v78 = vld [vmem:[%s77] sm:$0x1]
    %79 = vrot.lane.b32.xlu0 %v78, 24
    %v80 = vpop.permute.xlu0 %79
    %vm81 = vcmask 261312
    %82 = vst.msk [vmem:[#allocation0] sm:$0x1] %vm81, %v80
    %s83 = scalar_lea.vmem %s0, 2
    %v84 = vld [vmem:[%s83] sm:$0x1]
    %85 = vrot.lane.b32.xlu0 %v84, 16
    %v86 = vpop.permute.xlu0 %85
    %vm87 = vcmask 195712
    %88 = vst.msk [vmem:[#allocation0] sm:$0x1] %vm87, %v86
    %s89 = scalar_lea.vmem %s0, 1
    %v90 = vld [vmem:[%s89] sm:$0x1]
    %91 = vrot.lane.b32.xlu0 %v90, 8
    %v92 = vpop.permute.xlu0 %91
    %vm93 = vcmask 130112
    %94 = vst.msk [vmem:[#allocation0] sm:$0x1] %vm93, %v92
    %s96 = sshllo.u32 0, 1
    %v98 = vld [vmem:[#allocation0] sm:%s96]
    %s99 = sshllo.u32 0, 1
    %100 = vst [vmem:[%s1] sm:%s99] %v98

// kernel: inconv_forward.1
$region0: #{inconv_forward.1}
  #allocation0 [shape = 'u32[]', space=smem, size = 0x4, offset = 0x4, fixed_abs, tag = 'smem constant byte address 0x4 - core index']
  #allocation1 [shape = 'u32[144,128]{1,0:T(1,128)}', space=vmem, size = 0x12000, scoped, tag = 'internal scratch']
  %s0 = inlined_call_operand.vmem [shape: f32[2,16,64], index: 0, kind: input, shape index: {}]
  %s1 = inlined_call_operand.vmem [shape: bf16[192,128], index: 1, kind: input, shape index: {}]
  %s2 = inlined_call_operand.vmem [shape: bf16[384,128], index: 2, kind: input, shape index: {}]
  %s3 = inlined_call_operand.vmem [shape: f32[2,128], index: 3, kind: input, shape index: {}]
  %s4 = inlined_call_operand.vmem [shape: f32[2,128], index: 4, kind: input, shape index: {}]
  %s5 = inlined_call_operand.vmem [shape: f32[32,128], index: 5, kind: output, shape index: {}]
  %s6 = sld [smem:[#allocation0]]
  $region30: #{inconv_forward.1} parent=0
    _
  %s8 = ssub.s32 1, %s6
  %s9 = scalar_select 0, %s8, %s6
  // Predicated region
  $region2: #{inconv_forward.1} parent=0 // pred_check
    _
  $region3: #{inconv_forward.1} parent=0 // pred_check_branch
    %11 = sbr.rel (0) target = $region5
  $region4: #{inconv_forward.1} parent=0 // pred_region
    _
  $region5: #{inconv_forward.1} parent=0 // pred_fallthru
    _
  // Predicated region
  $region6: #{inconv_forward.1} parent=0 // pred_check
    _
  $region7: #{inconv_forward.1} parent=0 // pred_check_branch
    %13 = sbr.rel (0) target = $region9
  $region8: #{inconv_forward.1} parent=0 // pred_region
    _
  $region9: #{inconv_forward.1} parent=0 // pred_fallthru
    _
  // Predicated region
  $region10: #{inconv_forward.1} parent=0 // pred_check
    _
  $region11: #{inconv_forward.1} parent=0 // pred_check_branch
    %15 = sbr.rel (0) target = $region13
  $region12: #{inconv_forward.1} parent=0 // pred_region
    _
  $region13: #{inconv_forward.1} parent=0 // pred_fallthru
    _
  // Predicated region
  $region14: #{inconv_forward.1} parent=0 // pred_check
    _
  $region15: #{inconv_forward.1} parent=0 // pred_check_branch
    %17 = sbr.rel (0) target = $region17
  $region16: #{inconv_forward.1} parent=0 // pred_region
    _
  $region17: #{inconv_forward.1} parent=0 // pred_fallthru
    _
  // Predicated region
  $region18: #{inconv_forward.1} parent=0 // pred_check
    _
  $region19: #{inconv_forward.1} parent=0 // pred_check_branch
    %19 = sbr.rel (0) target = $region21
  $region20: #{inconv_forward.1} parent=0 // pred_region
    _
  $region21: #{inconv_forward.1} parent=0 // pred_fallthru
    _
  %v21 = vlaneseq
  %v22 = vshrl.u32 %v21, 7
  %v23 = vadd.s32 %v22, 8
  %v24 = vadd.s32 %v22, 16
  %v25 = vadd.s32 %v22, 24
  %v26 = vadd.s32 %v22, 32
  %v27 = vadd.s32 %v22, 40
  %v28 = vadd.s32 %v22, 48
  %v29 = vadd.s32 %v22, 56
  %v30 = vadd.s32 %v22, 64
  %v31 = vadd.s32 %v22, 72
  %v32 = vadd.s32 %v22, 80
  %v33 = vadd.s32 %v22, 88
  %v34 = vadd.s32 %v22, 96
  %v35 = vadd.s32 %v22, 104
  %v36 = vadd.s32 %v22, 112
  %v37 = vadd.s32 %v22, 120
  %vm38 = vcmp.lt.s32.totalorder %v22, 0
  %v39 = vsub.s32 0, %v22
  %v40 = vsel %vm38, %v39, %v22
  %v41 = vshrl.u32 %v40, 3
  %v42 = vand.u32 %v40, 7
  %v43 = vsub.s32 0, %v42
  %v44 = vsel %vm38, %v43, %v42
  %vm45 = vcmp.lt.s32.totalorder %v23, 0
  %v46 = vsub.s32 0, %v23
  %v47 = vsel %vm45, %v46, %v23
  %v48 = vshrl.u32 %v47, 3
  %v49 = vand.u32 %v47, 7
  %v50 = vsub.s32 0, %v49
  %v51 = vsel %vm45, %v50, %v49
  %vm52 = vcmp.lt.s32.totalorder %v24, 0
  %v53 = vsub.s32 0, %v24
  %v54 = vsel %vm52, %v53, %v24
  %v55 = vshrl.u32 %v54, 3
  %v56 = vand.u32 %v54, 7
  %v57 = vsub.s32 0, %v56
  %v58 = vsel %vm52, %v57, %v56
  %vm59 = vcmp.lt.s32.totalorder %v25, 0
  %v60 = vsub.s32 0, %v25
  %v61 = vsel %vm59, %v60, %v25
  %v62 = vshrl.u32 %v61, 3
  %v63 = vand.u32 %v61, 7
  %v64 = vsub.s32 0, %v63
  %v65 = vsel %vm59, %v64, %v63
  %vm66 = vcmp.lt.s32.totalorder %v26, 0
  %v67 = vsub.s32 0, %v26
  %v68 = vsel %vm66, %v67, %v26
  %v69 = vshrl.u32 %v68, 3
  %v70 = vand.u32 %v68, 7
  %v71 = vsub.s32 0, %v70
  %v72 = vsel %vm66, %v71, %v70
  %vm73 = vcmp.lt.s32.totalorder %v27, 0
  %v74 = vsub.s32 0, %v27
  %v75 = vsel %vm73, %v74, %v27
  %v76 = vshrl.u32 %v75, 3
  %v77 = vand.u32 %v75, 7
  %v78 = vsub.s32 0, %v77
  %v79 = vsel %vm73, %v78, %v77
  %vm80 = vcmp.lt.s32.totalorder %v28, 0
  %v81 = vsub.s32 0, %v28
  %v82 = vsel %vm80, %v81, %v28
  %v83 = vshrl.u32 %v82, 3
  %v84 = vand.u32 %v82, 7
  %v85 = vsub.s32 0, %v84
  %v86 = vsel %vm80, %v85, %v84
  %vm87 = vcmp.lt.s32.totalorder %v29, 0
  %v88 = vsub.s32 0, %v29
  %v89 = vsel %vm87, %v88, %v29
  %v90 = vshrl.u32 %v89, 3
  %v91 = vand.u32 %v89, 7
  %v92 = vsub.s32 0, %v91
  %v93 = vsel %vm87, %v92, %v91
  %vm94 = vcmp.lt.s32.totalorder %v30, 0
  %v95 = vsub.s32 0, %v30
  %v96 = vsel %vm94, %v95, %v30
  %v97 = vshrl.u32 %v96, 3
  %v98 = vand.u32 %v96, 7
  %v99 = vsub.s32 0, %v98
  %v100 = vsel %vm94, %v99, %v98
  %vm101 = vcmp.lt.s32.totalorder %v31, 0
  %v102 = vsub.s32 0, %v31
  %v103 = vsel %vm101, %v102, %v31
  %v104 = vshrl.u32 %v103, 3
  %v105 = vand.u32 %v103, 7
  %v106 = vsub.s32 0, %v105
  %v107 = vsel %vm101, %v106, %v105
  %vm108 = vcmp.lt.s32.totalorder %v32, 0
  %v109 = vsub.s32 0, %v32
  %v110 = vsel %vm108, %v109, %v32
  %v111 = vshrl.u32 %v110, 3
  %v112 = vand.u32 %v110, 7
  %v113 = vsub.s32 0, %v112
  %v114 = vsel %vm108, %v113, %v112
  %vm115 = vcmp.lt.s32.totalorder %v33, 0
  %v116 = vsub.s32 0, %v33
  %v117 = vsel %vm115, %v116, %v33
  %v118 = vshrl.u32 %v117, 3
  %v119 = vand.u32 %v117, 7
  %v120 = vsub.s32 0, %v119
  %v121 = vsel %vm115, %v120, %v119
  %vm122 = vcmp.lt.s32.totalorder %v34, 0
  %v123 = vsub.s32 0, %v34
  %v124 = vsel %vm122, %v123, %v34
  %v125 = vshrl.u32 %v124, 3
  %v126 = vand.u32 %v124, 7
  %v127 = vsub.s32 0, %v126
  %v128 = vsel %vm122, %v127, %v126
  %vm129 = vcmp.lt.s32.totalorder %v35, 0
  %v130 = vsub.s32 0, %v35
  %v131 = vsel %vm129, %v130, %v35
  %v132 = vshrl.u32 %v131, 3
  %v133 = vand.u32 %v131, 7
  %v134 = vsub.s32 0, %v133
  %v135 = vsel %vm129, %v134, %v133
  %vm136 = vcmp.lt.s32.totalorder %v36, 0
  %v137 = vsub.s32 0, %v36
  %v138 = vsel %vm136, %v137, %v36
  %v139 = vshrl.u32 %v138, 3
  %v140 = vand.u32 %v138, 7
  %v141 = vsub.s32 0, %v140
  %v142 = vsel %vm136, %v141, %v140
  %vm143 = vcmp.lt.s32.totalorder %v37, 0
  %v144 = vsub.s32 0, %v37
  %v145 = vsel %vm143, %v144, %v37
  %v146 = vshrl.u32 %v145, 3
  %v147 = vand.u32 %v145, 7
  %v148 = vsub.s32 0, %v147
  %v149 = vsel %vm143, %v148, %v147
  %vm150 = vcmp.ne.s32.totalorder %v44, 0
  %vm151 = vcmp.ne.s32.totalorder %v51, 0
  %vm152 = vcmp.ne.s32.totalorder %v58, 0
  %vm153 = vcmp.ne.s32.totalorder %v65, 0
  %vm154 = vcmp.ne.s32.totalorder %v72, 0
  %vm155 = vcmp.ne.s32.totalorder %v79, 0
  %vm156 = vcmp.ne.s32.totalorder %v86, 0
  %vm157 = vcmp.ne.s32.totalorder %v93, 0
  %vm158 = vcmp.ne.s32.totalorder %v100, 0
  %vm159 = vcmp.ne.s32.totalorder %v107, 0
  %vm160 = vcmp.ne.s32.totalorder %v114, 0
  %vm161 = vcmp.ne.s32.totalorder %v121, 0
  %vm162 = vcmp.ne.s32.totalorder %v128, 0
  %vm163 = vcmp.ne.s32.totalorder %v135, 0
  %vm164 = vcmp.ne.s32.totalorder %v142, 0
  %vm165 = vcmp.ne.s32.totalorder %v149, 0
  %vm166 = vcmp.lt.s32.totalorder %v44, 0
  %vm167 = vcmp.lt.s32.totalorder %v51, 0
  %vm168 = vcmp.lt.s32.totalorder %v58, 0
  %vm169 = vcmp.lt.s32.totalorder %v65, 0
  %vm170 = vcmp.lt.s32.totalorder %v72, 0
  %vm171 = vcmp.lt.s32.totalorder %v79, 0
  %vm172 = vcmp.lt.s32.totalorder %v86, 0
  %vm173 = vcmp.lt.s32.totalorder %v93, 0
  %vm174 = vcmp.lt.s32.totalorder %v100, 0
  %vm175 = vcmp.lt.s32.totalorder %v107, 0
  %vm176 = vcmp.lt.s32.totalorder %v114, 0
  %vm177 = vcmp.lt.s32.totalorder %v121, 0
  %vm178 = vcmp.lt.s32.totalorder %v128, 0
  %vm179 = vcmp.lt.s32.totalorder %v135, 0
  %vm180 = vcmp.lt.s32.totalorder %v142, 0
  %vm181 = vcmp.lt.s32.totalorder %v149, 0
  %vm182 = vmand %vm166, %vm150
  %vm183 = vmand %vm167, %vm151
  %vm184 = vmand %vm168, %vm152
  %vm185 = vmand %vm169, %vm153
  %vm186 = vmand %vm170, %vm154
  %vm187 = vmand %vm171, %vm155
  %vm188 = vmand %vm172, %vm156
  %vm189 = vmand %vm173, %vm157
  %vm190 = vmand %vm174, %vm158
  %vm191 = vmand %vm175, %vm159
  %vm192 = vmand %vm176, %vm160
  %vm193 = vmand %vm177, %vm161
  %vm194 = vmand %vm178, %vm162
  %vm195 = vmand %vm179, %vm163
  %vm196 = vmand %vm180, %vm164
  %vm197 = vmand %vm181, %vm165
  %v198 = vadd.s32 %v44, 8
  %v199 = vadd.s32 %v51, 8
  %v200 = vadd.s32 %v58, 8
  %v201 = vadd.s32 %v65, 8
  %v202 = vadd.s32 %v72, 8
  %v203 = vadd.s32 %v79, 8
  %v204 = vadd.s32 %v86, 8
  %v205 = vadd.s32 %v93, 8
  %v206 = vadd.s32 %v100, 8
  %v207 = vadd.s32 %v107, 8
  %v208 = vadd.s32 %v114, 8
  %v209 = vadd.s32 %v121, 8
  %v210 = vadd.s32 %v128, 8
  %v211 = vadd.s32 %v135, 8
  %v212 = vadd.s32 %v142, 8
  %v213 = vadd.s32 %v149, 8
  %v214 = vsel %vm182, %v198, %v44
  %v215 = vsel %vm183, %v199, %v51
  %v216 = vsel %vm184, %v200, %v58
  %v217 = vsel %vm185, %v201, %v65
  %v218 = vsel %vm186, %v202, %v72
  %v219 = vsel %vm187, %v203, %v79
  %v220 = vsel %vm188, %v204, %v86
  %v221 = vsel %vm189, %v205, %v93
  %v222 = vsel %vm190, %v206, %v100
  %v223 = vsel %vm191, %v207, %v107
  %v224 = vsel %vm192, %v208, %v114
  %v225 = vsel %vm193, %v209, %v121
  %v226 = vsel %vm194, %v210, %v128
  %v227 = vsel %vm195, %v211, %v135
  %v228 = vsel %vm196, %v212, %v142
  %v229 = vsel %vm197, %v213, %v149
  %v230 = vlaneseq
  %v231 = vand.u32 %v230, 127
  %vm232 = vcmp.lt.s32.totalorder %v231, 0
  %v233 = vsub.s32 0, %v231
  %v234 = vsel %vm232, %v233, %v231
  %v235 = vshrl.u32 %v234, 3
  %v236 = vand.u32 %v234, 7
  %v237 = vsub.s32 0, %v236
  %v238 = vsel %vm232, %v237, %v236
  %vm239 = vcmp.ne.s32.totalorder %v238, 0
  %vm240 = vcmp.lt.s32.totalorder %v238, 0
  %vm241 = vmand %vm240, %vm239
  %v242 = vadd.s32 %v238, 8
  %v243 = vsel %vm241, %v242, %v238
  %vm244 = vcmp.eq.s32.totalorder %v214, %v243
  %vm245 = vcmp.eq.s32.totalorder %v215, %v243
  %vm246 = vcmp.eq.s32.totalorder %v216, %v243
  %vm247 = vcmp.eq.s32.totalorder %v217, %v243
  %vm248 = vcmp.eq.s32.totalorder %v218, %v243
  %vm249 = vcmp.eq.s32.totalorder %v219, %v243
  %vm250 = vcmp.eq.s32.totalorder %v220, %v243
  %vm251 = vcmp.eq.s32.totalorder %v221, %v243
  %vm252 = vcmp.eq.s32.totalorder %v222, %v243
  %vm253 = vcmp.eq.s32.totalorder %v223, %v243
  %vm254 = vcmp.eq.s32.totalorder %v224, %v243
  %vm255 = vcmp.eq.s32.totalorder %v225, %v243
  %vm256 = vcmp.eq.s32.totalorder %v226, %v243
  %vm257 = vcmp.eq.s32.totalorder %v227, %v243
  %vm258 = vcmp.eq.s32.totalorder %v228, %v243
  %vm259 = vcmp.eq.s32.totalorder %v229, %v243
  %v260 = vsel %vm244, 0.001953125, 0.0
  %v261 = vsel %vm245, 0.001953125, 0.0
  %v262 = vsel %vm246, 0.001953125, 0.0
  %v263 = vsel %vm247, 0.001953125, 0.0
  %v264 = vsel %vm248, 0.001953125, 0.0
  %v265 = vsel %vm249, 0.001953125, 0.0
  %v266 = vsel %vm250, 0.001953125, 0.0
  %v267 = vsel %vm251, 0.001953125, 0.0
  %v268 = vsel %vm252, 0.001953125, 0.0
  %v269 = vsel %vm253, 0.001953125, 0.0
  %v270 = vsel %vm254, 0.001953125, 0.0
  %v271 = vsel %vm255, 0.001953125, 0.0
  %v272 = vsel %vm256, 0.001953125, 0.0
  %v273 = vsel %vm257, 0.001953125, 0.0
  %v274 = vsel %vm258, 0.001953125, 0.0
  %v275 = vsel %vm259, 0.001953125, 0.0
  %v276 = vld [vmem:[%s0] sm:$0xff]
  %v277 = vld [vmem:[%s0 + $0x8] sm:$0xff]
  %v278 = vld [vmem:[%s0 + $0x10] sm:$0xff]
  %v279 = vld [vmem:[%s0 + $0x18] sm:$0xff]
  %vm284 = vcmask 1040384
  %v285 = vrot.slane %v276, 7
  %v286 = vrot.slane %v277, 7
  %v287 = vsel %vm284, %v285, %v286
  %v288 = vrot.slane %v278, 7
  %v289 = vrot.slane %v279, 7
  %v290 = vsel %vm284, %v288, %v289
  %v295 = vsel %vm284, 0.0, %v285
  %v296 = vsel %vm284, 0.0, %v288
  %vm297 = vcmask 1046528
  %v298 = vrot.slane %v276, 1
  %v299 = vrot.slane %v277, 1
  %v300 = vsel %vm297, %v298, %v299
  %v301 = vrot.slane %v278, 1
  %v302 = vrot.slane %v279, 1
  %v303 = vsel %vm297, %v301, %v302
  %v308 = vsel %vm297, %v299, 0.0
  %v309 = vsel %vm297, %v302, 0.0
  %310 = vrot.lane.b32.xlu0 %v276, 64
  %v311 = vpop.permute.xlu0 %310
  %312 = vrot.lane.b32.xlu0 %v277, 64
  %v313 = vpop.permute.xlu0 %312
  %314 = vrot.lane.b32.xlu0 %v278, 64
  %v315 = vpop.permute.xlu0 %314
  %316 = vrot.lane.b32.xlu0 %v279, 64
  %v317 = vpop.permute.xlu0 %316
  %vm322 = vcmask 523264
  %v323 = vsel %vm322, %v295, %v311
  %v324 = vsel %vm322, %v287, %v313
  %v325 = vsel %vm322, %v296, %v315
  %v326 = vsel %vm322, %v290, %v317
  %v327 = vpack.c.bf16 %v324, %v323
  %v328 = vpack.c.bf16 %v308, %v300
  %v329 = vpack.c.bf16 %v326, %v325
  %v330 = vpack.c.bf16 %v309, %v303
  %v331 = vld [vmem:[%s1] sm:$0xf]
  %v332 = vld [vmem:[%s1 + $0x4] sm:$0xf]
  %v333 = vld [vmem:[%s1 + $0x8] sm:$0xf]
  %v334 = vld [vmem:[%s1 + $0xc] sm:$0xf]
  %v335 = vld [vmem:[%s1 + $0x10] sm:$0xf]
  %v336 = vld [vmem:[%s1 + $0x14] sm:$0xf]
  %v337 = vld [vmem:[%s1 + $0x18] sm:$0xf]
  %v338 = vld [vmem:[%s1 + $0x1c] sm:$0xf]
  %v339 = vld [vmem:[%s1 + $0x20] sm:$0xf]
  %v340 = vld [vmem:[%s1 + $0x24] sm:$0xf]
  %v341 = vld [vmem:[%s1 + $0x28] sm:$0xf]
  %v342 = vld [vmem:[%s1 + $0x2c] sm:$0xf]
  %v343 = vld [vmem:[%s1 + $0x30] sm:$0xf]
  %v344 = vld [vmem:[%s1 + $0x34] sm:$0xf]
  %v345 = vld [vmem:[%s1 + $0x38] sm:$0xf]
  %v346 = vld [vmem:[%s1 + $0x3c] sm:$0xf]
  %v347 = vld [vmem:[%s1 + $0x40] sm:$0xf]
  %v348 = vld [vmem:[%s1 + $0x44] sm:$0xf]
  %v349 = vld [vmem:[%s1 + $0x48] sm:$0xf]
  %v350 = vld [vmem:[%s1 + $0x4c] sm:$0xf]
  %v351 = vld [vmem:[%s1 + $0x50] sm:$0xf]
  %v352 = vld [vmem:[%s1 + $0x54] sm:$0xf]
  %v353 = vld [vmem:[%s1 + $0x58] sm:$0xf]
  %v354 = vld [vmem:[%s1 + $0x5c] sm:$0xf]
  %v379 = vunpack.c.l.b16 %v331
  %v380 = vunpack.c.l.b16 %v332
  %v381 = vunpack.c.l.b16 %v333
  %v382 = vunpack.c.l.b16 %v334
  %v383 = vunpack.c.l.b16 %v335
  %v384 = vunpack.c.l.b16 %v336
  %v385 = vunpack.c.l.b16 %v337
  %v386 = vunpack.c.l.b16 %v338
  %v387 = vunpack.c.l.b16 %v339
  %v388 = vunpack.c.l.b16 %v340
  %v389 = vunpack.c.l.b16 %v341
  %v390 = vunpack.c.l.b16 %v342
  %v391 = vunpack.c.l.b16 %v343
  %v392 = vunpack.c.l.b16 %v344
  %v393 = vunpack.c.l.b16 %v345
  %v394 = vunpack.c.l.b16 %v346
  %v395 = vunpack.c.l.b16 %v347
  %v396 = vunpack.c.l.b16 %v348
  %v397 = vunpack.c.l.b16 %v349
  %v398 = vunpack.c.l.b16 %v350
  %v399 = vunpack.c.l.b16 %v351
  %v400 = vunpack.c.l.b16 %v352
  %v401 = vunpack.c.l.b16 %v353
  %v402 = vunpack.c.l.b16 %v354
  %v403 = vpack.c.b16 %v380, %v379
  %v404 = vpack.c.b16 %v382, %v381
  %v405 = vpack.c.b16 %v384, %v383
  %v406 = vpack.c.b16 %v386, %v385
  %v407 = vpack.c.b16 %v388, %v387
  %v408 = vpack.c.b16 %v390, %v389
  %v409 = vpack.c.b16 %v392, %v391
  %v410 = vpack.c.b16 %v394, %v393
  %v411 = vpack.c.b16 %v396, %v395
  %v412 = vpack.c.b16 %v398, %v397
  %v413 = vpack.c.b16 %v400, %v399
  %v414 = vpack.c.b16 %v402, %v401
  %v428 = vsel %vm322, %v328, 0
  %v431 = vsel %vm322, %v330, 0
  %433 = vmatprep.subr.bf16.mxu0 0
  %434 = vmatpush1.bf16.msra.mxu0 %v403
  %435 = vmatprep.subr.bf16.mxu0 0
  %436 = vmatpush1.bf16.msra.mxu0 %v404
  %437 = vmatprep.subr.bf16.mxu0 0
  %438 = vmatpush1.bf16.msra.mxu0 %v405
  %439 = vmatprep.subr.bf16.mxu0 0
  %440 = vmatpush1.bf16.msra.mxu0 %v406
  %441 = vmatprep.subr.bf16.mxu0 0
  %442 = vmatpush1.bf16.msra.mxu0 %v407
  %443 = vmatprep.subr.bf16.mxu0 0
  %444 = vmatpush1.bf16.msra.mxu0 %v408
  %445 = vmatprep.subr.bf16.mxu0 0
  %446 = vmatpush1.bf16.msra.mxu0 %v409
  %447 = vmatprep.subr.bf16.mxu0 0
  %448 = vmatpush1.bf16.msra.mxu0 %v410
  %449 = vmatprep.subr.bf16.mxu0 0
  %450 = vmatpush1.bf16.msra.mxu0 %v411
  %451 = vmatprep.subr.bf16.mxu0 0
  %452 = vmatpush1.bf16.msra.mxu0 %v412
  %453 = vmatprep.subr.bf16.mxu0 0
  %454 = vmatpush1.bf16.msra.mxu0 %v413
  %455 = vmatprep.subr.bf16.mxu0 0
  %456 = vmatpush1.bf16.msra.mxu0 %v414
  %457 = vmatprep.subr.bf16.mxu0 0
  %458 = vmatpush1.bf16.msra.mxu0 0
  %459 = vmatprep.subr.bf16.mxu0 0
  %460 = vmatpush1.bf16.msra.mxu0 0
  %461 = vmatprep.subr.bf16.mxu0 0
  %462 = vmatpush1.bf16.msra.mxu0 0
  %463 = vmatprep.subr.bf16.mxu0 0
  %464 = vmatpush1.bf16.msra.mxu0 0
  %465 = vmatprep.mubr.bf16.mxu0 %v428
  %466 = vmatmul.mubr.bf16.gmra.mrb[0].mxu0 %v327
  %v467 = vpop.f32.mrb[0].mxu0
  %v468 = vadd.f32 0.0, %v467
  %v469 = vpop.f32.mrb[0].mxu0
  %v470 = vpop.f32.mrb[0].mxu0
  %v471 = vadd.f32 0.0, %v470
  %v472 = vpop.f32.mrb[0].mxu0
  %473 = vmatprep.mubr.bf16.mxu0 %v431
  %474 = vmatmul.mubr.bf16.gmra.mrb[0].mxu0 %v329
  %v475 = vpop.f32.mrb[0].mxu0
  %v476 = vadd.f32 0.0, %v475
  %v477 = vpop.f32.mrb[0].mxu0
  %v478 = vpop.f32.mrb[0].mxu0
  %v479 = vadd.f32 0.0, %v478
  %v480 = vpop.f32.mrb[0].mxu0
  %481 = vdwg.mxu0
  %v482 = vld [vmem:[%s3] sm:$0x3]
  %v483 = vadd.f32 %v468, %v471
  %v484 = vadd.f32 %v483, %v476
  %v485 = vadd.f32 %v484, %v479
  %v486 = vrot.slane %v485, 4
  %v487 = vadd.f32 %v485, %v486
  %v488 = vrot.slane %v487, 2
  %v489 = vadd.f32 %v487, %v488
  %v490 = vrot.slane %v489, 1
  %v491 = vadd.f32 %v489, %v490
  %v492 = vmul.f32 %v468, %v468
  %v493 = vmul.f32 %v471, %v471
  %v494 = vmul.f32 %v476, %v476
  %v495 = vmul.f32 %v479, %v479
  %v496 = vadd.f32 %v492, %v493
  %v497 = vadd.f32 %v496, %v494
  %v498 = vadd.f32 %v497, %v495
  %v499 = vrot.slane %v498, 4
  %v500 = vadd.f32 %v498, %v499
  %v501 = vrot.slane %v500, 2
  %v502 = vadd.f32 %v500, %v501
  %v503 = vrot.slane %v502, 1
  %v504 = vadd.f32 %v502, %v503
  %v505 = vsel %vm284, %v491, %v504
  %506 = vmatprep.subr.mxu0 0.0
  %507 = vmatpush1.msra.mxu0 %v260
  %508 = vmatprep.subr.mxu0 0.0
  %509 = vmatpush1.msra.mxu0 %v261
  %510 = vmatprep.subr.mxu0 0.0
  %511 = vmatpush1.msra.mxu0 %v262
  %512 = vmatprep.subr.mxu0 0.0
  %513 = vmatpush1.msra.mxu0 %v263
  %514 = vmatprep.subr.mxu0 0.0
  %515 = vmatpush1.msra.mxu0 %v264
  %516 = vmatprep.subr.mxu0 0.0
  %517 = vmatpush1.msra.mxu0 %v265
  %518 = vmatprep.subr.mxu0 0.0
  %519 = vmatpush1.msra.mxu0 %v266
  %520 = vmatprep.subr.mxu0 0.0
  %521 = vmatpush1.msra.mxu0 %v267
  %522 = vmatprep.subr.mxu0 0.0
  %523 = vmatpush1.msra.mxu0 %v268
  %524 = vmatprep.subr.mxu0 0.0
  %525 = vmatpush1.msra.mxu0 %v269
  %526 = vmatprep.subr.mxu0 0.0
  %527 = vmatpush1.msra.mxu0 %v270
  %528 = vmatprep.subr.mxu0 0.0
  %529 = vmatpush1.msra.mxu0 %v271
  %530 = vmatprep.subr.mxu0 0.0
  %531 = vmatpush1.msra.mxu0 %v272
  %532 = vmatprep.subr.mxu0 0.0
  %533 = vmatpush1.msra.mxu0 %v273
  %534 = vmatprep.subr.mxu0 0.0
  %535 = vmatpush1.msra.mxu0 %v274
  %536 = vmatprep.subr.mxu0 0.0
  %537 = vmatpush1.msra.mxu0 %v275
  %538 = vmatprep.subr.mxu0 0.0
  %539 = vmatpush1.msra.mxu0 0.0
  %540 = vmatprep.subr.mxu0 0.0
  %541 = vmatpush1.msra.mxu0 0.0
  %542 = vmatprep.subr.mxu0 0.0
  %543 = vmatpush1.msra.mxu0 0.0
  %544 = vmatprep.subr.mxu0 0.0
  %545 = vmatpush1.msra.mxu0 0.0
  %546 = vmatprep.subr.mxu0 0.0
  %547 = vmatpush1.msra.mxu0 0.0
  %548 = vmatprep.subr.mxu0 0.0
  %549 = vmatpush1.msra.mxu0 0.0
  %550 = vmatprep.subr.mxu0 0.0
  %551 = vmatpush1.msra.mxu0 0.0
  %552 = vmatprep.subr.mxu0 0.0
  %553 = vmatpush1.msra.mxu0 0.0
  %554 = vmatprep.subr.mxu0 0.0
  %555 = vmatpush1.msra.mxu0 0.0
  %556 = vmatprep.subr.mxu0 0.0
  %557 = vmatpush1.msra.mxu0 0.0
  %558 = vmatprep.subr.mxu0 0.0
  %559 = vmatpush1.msra.mxu0 0.0
  %560 = vmatprep.subr.mxu0 0.0
  %561 = vmatpush1.msra.mxu0 0.0
  %562 = vmatprep.subr.mxu0 0.0
  %563 = vmatpush1.msra.mxu0 0.0
  %564 = vmatprep.subr.mxu0 0.0
  %565 = vmatpush1.msra.mxu0 0.0
  %566 = vmatprep.subr.mxu0 0.0
  %567 = vmatpush1.msra.mxu0 0.0
  %568 = vmatprep.subr.mxu0 0.0
  %569 = vmatpush1.msra.mxu0 0.0
  %570 = vmatprep.mubr.f32.mxu0 0.0
  %571 = vmatmul.mubr.f32.gmra.mrb[0].mxu0 %v505
  %v572 = vpop.f32.mrb[0].mxu0
  %v573 = vadd.f32 0.0, %v572
  %v574 = vpop.f32.mrb[0].mxu0
  %575 = vdwg.mxu0
  %v576 = vmul.f32 %v573, %v573
  %v578 = vrot.slane %v576, 7
  %v580 = vsub.f32 %v573, %v578
  %v581 = vadd.f32 %v580, 1e-05
  %v582 = vrsqrt.pop %v581
  %v584 = vrot.slane %v582, 1
  %v586 = vmul.f32 %v482, %v584
  %v587 = vmul.f32 %v573, %v586
  %v589 = vrot.slane %v587, 7
  %v591 = vsub.f32 %v482, %v589
  %v592 = vlaneseq
  %v593 = vshrl.u32 %v592, 7
  %v594 = vsub.s32 0, %v593
  %v595 = vrot.slane %v586, %v594
  %v596 = vmul.f32 %v468, %v595
  %v597 = vmul.f32 %v471, %v595
  %v598 = vmul.f32 %v476, %v595
  %v599 = vmul.f32 %v479, %v595
  %v600 = vlaneseq
  %v601 = vshrl.u32 %v600, 7
  %v602 = vsub.s32 1, %v601
  %v603 = vrot.slane %v591, %v602
  %v604 = vadd.f32 %v596, %v603
  %v605 = vadd.f32 %v597, %v603
  %v606 = vadd.f32 %v598, %v603
  %v607 = vadd.f32 %v599, %v603
  %v608 = vmax.f32 %v604, 0.0
  %v609 = vmax.f32 %v605, 0.0
  %v610 = vmax.f32 %v606, 0.0
  %v611 = vmax.f32 %v607, 0.0
  %v616 = vrot.slane %v608, 7
  %v617 = vrot.slane %v609, 7
  %v618 = vsel %vm284, %v616, %v617
  %v619 = vrot.slane %v610, 7
  %v620 = vrot.slane %v611, 7
  %v621 = vsel %vm284, %v619, %v620
  %v626 = vsel %vm284, 0.0, %v616
  %v627 = vsel %vm284, 0.0, %v619
  %v628 = vrot.slane %v608, 1
  %v629 = vrot.slane %v609, 1
  %v630 = vsel %vm297, %v628, %v629
  %v631 = vrot.slane %v610, 1
  %v632 = vrot.slane %v611, 1
  %v633 = vsel %vm297, %v631, %v632
  %v638 = vsel %vm297, %v629, 0.0
  %v639 = vsel %vm297, %v632, 0.0
  %v640 = vpack.c.bf16 %v618, %v626
  %v641 = vpack.c.bf16 %v609, %v608
  %v642 = vpack.c.bf16 %v638, %v630
  %v643 = vpack.c.bf16 %v621, %v627
  %v644 = vpack.c.bf16 %v611, %v610
  %v645 = vpack.c.bf16 %v639, %v633
  %v646 = vld [vmem:[%s2] sm:$0xf]
  %v647 = vld [vmem:[%s2 + $0x4] sm:$0xf]
  %v648 = vld [vmem:[%s2 + $0x8] sm:$0xf]
  %v649 = vld [vmem:[%s2 + $0xc] sm:$0xf]
  %v650 = vld [vmem:[%s2 + $0x10] sm:$0xf]
  %v651 = vld [vmem:[%s2 + $0x14] sm:$0xf]
  %v652 = vld [vmem:[%s2 + $0x18] sm:$0xf]
  %v653 = vld [vmem:[%s2 + $0x1c] sm:$0xf]
  %v654 = vld [vmem:[%s2 + $0x20] sm:$0xf]
  %v655 = vld [vmem:[%s2 + $0x24] sm:$0xf]
  %v656 = vld [vmem:[%s2 + $0x28] sm:$0xf]
  %v657 = vld [vmem:[%s2 + $0x2c] sm:$0xf]
  %v658 = vld [vmem:[%s2 + $0x30] sm:$0xf]
  %v659 = vld [vmem:[%s2 + $0x34] sm:$0xf]
  %v660 = vld [vmem:[%s2 + $0x38] sm:$0xf]
  %v661 = vld [vmem:[%s2 + $0x3c] sm:$0xf]
  %v662 = vld [vmem:[%s2 + $0x40] sm:$0xf]
  %v663 = vld [vmem:[%s2 + $0x44] sm:$0xf]
  %v664 = vld [vmem:[%s2 + $0x48] sm:$0xf]
  %v665 = vld [vmem:[%s2 + $0x4c] sm:$0xf]
  %v666 = vld [vmem:[%s2 + $0x50] sm:$0xf]
  %v667 = vld [vmem:[%s2 + $0x54] sm:$0xf]
  %v668 = vld [vmem:[%s2 + $0x58] sm:$0xf]
  %v669 = vld [vmem:[%s2 + $0x5c] sm:$0xf]
  %v670 = vld [vmem:[%s2 + $0x60] sm:$0xf]
  %v671 = vld [vmem:[%s2 + $0x64] sm:$0xf]
  %v672 = vld [vmem:[%s2 + $0x68] sm:$0xf]
  %v673 = vld [vmem:[%s2 + $0x6c] sm:$0xf]
  %v674 = vld [vmem:[%s2 + $0x70] sm:$0xf]
  %v675 = vld [vmem:[%s2 + $0x74] sm:$0xf]
  %v676 = vld [vmem:[%s2 + $0x78] sm:$0xf]
  %v677 = vld [vmem:[%s2 + $0x7c] sm:$0xf]
  %v678 = vld [vmem:[%s2 + $0x80] sm:$0xf]
  %v679 = vld [vmem:[%s2 + $0x84] sm:$0xf]
  %v680 = vld [vmem:[%s2 + $0x88] sm:$0xf]
  %v681 = vld [vmem:[%s2 + $0x8c] sm:$0xf]
  %v682 = vld [vmem:[%s2 + $0x90] sm:$0xf]
  %v683 = vld [vmem:[%s2 + $0x94] sm:$0xf]
  %v684 = vld [vmem:[%s2 + $0x98] sm:$0xf]
  %v685 = vld [vmem:[%s2 + $0x9c] sm:$0xf]
  %v686 = vld [vmem:[%s2 + $0xa0] sm:$0xf]
  %v687 = vld [vmem:[%s2 + $0xa4] sm:$0xf]
  %v688 = vld [vmem:[%s2 + $0xa8] sm:$0xf]
  %v689 = vld [vmem:[%s2 + $0xac] sm:$0xf]
  %v690 = vld [vmem:[%s2 + $0xb0] sm:$0xf]
  %v691 = vld [vmem:[%s2 + $0xb4] sm:$0xf]
  %v692 = vld [vmem:[%s2 + $0xb8] sm:$0xf]
  %v693 = vld [vmem:[%s2 + $0xbc] sm:$0xf]
  %v742 = vunpack.c.l.b16 %v646
  %v743 = vunpack.c.l.b16 %v647
  %v744 = vunpack.c.l.b16 %v648
  %v745 = vunpack.c.l.b16 %v649
  %v746 = vunpack.c.l.b16 %v650
  %v747 = vunpack.c.l.b16 %v651
  %v748 = vunpack.c.l.b16 %v652
  %v749 = vunpack.c.l.b16 %v653
  %v750 = vunpack.c.l.b16 %v654
  %v751 = vunpack.c.l.b16 %v655
  %v752 = vunpack.c.l.b16 %v656
  %v753 = vunpack.c.l.b16 %v657
  %v754 = vunpack.c.l.b16 %v658
  %v755 = vunpack.c.l.b16 %v659
  %v756 = vunpack.c.l.b16 %v660
  %v757 = vunpack.c.l.b16 %v661
  %v758 = vunpack.c.l.b16 %v662
  %v759 = vunpack.c.l.b16 %v663
  %v760 = vunpack.c.l.b16 %v664
  %v761 = vunpack.c.l.b16 %v665
  %v762 = vunpack.c.l.b16 %v666
  %v763 = vunpack.c.l.b16 %v667
  %v764 = vunpack.c.l.b16 %v668
  %v765 = vunpack.c.l.b16 %v669
  %v766 = vunpack.c.l.b16 %v670
  %v767 = vunpack.c.l.b16 %v671
  %v768 = vunpack.c.l.b16 %v672
  %v769 = vunpack.c.l.b16 %v673
  %v770 = vunpack.c.l.b16 %v674
  %v771 = vunpack.c.l.b16 %v675
  %v772 = vunpack.c.l.b16 %v676
  %v773 = vunpack.c.l.b16 %v677
  %v774 = vunpack.c.l.b16 %v678
  %v775 = vunpack.c.l.b16 %v679
  %v776 = vunpack.c.l.b16 %v680
  %v777 = vunpack.c.l.b16 %v681
  %v778 = vunpack.c.l.b16 %v682
  %v779 = vunpack.c.l.b16 %v683
  %v780 = vunpack.c.l.b16 %v684
  %v781 = vunpack.c.l.b16 %v685
  %v782 = vunpack.c.l.b16 %v686
  %v783 = vunpack.c.l.b16 %v687
  %v784 = vunpack.c.l.b16 %v688
  %v785 = vunpack.c.l.b16 %v689
  %v786 = vunpack.c.l.b16 %v690
  %v787 = vunpack.c.l.b16 %v691
  %v788 = vunpack.c.l.b16 %v692
  %v789 = vunpack.c.l.b16 %v693
  %v790 = vpack.c.b16 %v743, %v742
  %v791 = vpack.c.b16 %v745, %v744
  %v792 = vpack.c.b16 %v747, %v746
  %v793 = vpack.c.b16 %v749, %v748
  %v794 = vpack.c.b16 %v751, %v750
  %v795 = vpack.c.b16 %v753, %v752
  %v796 = vpack.c.b16 %v755, %v754
  %v797 = vpack.c.b16 %v757, %v756
  %v798 = vpack.c.b16 %v759, %v758
  %v799 = vpack.c.b16 %v761, %v760
  %v800 = vpack.c.b16 %v763, %v762
  %v801 = vpack.c.b16 %v765, %v764
  %v802 = vpack.c.b16 %v767, %v766
  %v803 = vpack.c.b16 %v769, %v768
  %v804 = vpack.c.b16 %v771, %v770
  %v805 = vpack.c.b16 %v773, %v772
  %v806 = vpack.c.b16 %v775, %v774
  %v807 = vpack.c.b16 %v777, %v776
  %v808 = vpack.c.b16 %v779, %v778
  %v809 = vpack.c.b16 %v781, %v780
  %v810 = vpack.c.b16 %v783, %v782
  %v811 = vpack.c.b16 %v785, %v784
  %v812 = vpack.c.b16 %v787, %v786
  %v813 = vpack.c.b16 %v789, %v788
  %838 = vmatprep.subr.bf16.mxu0 0
  %839 = vmatpush1.bf16.msra.mxu0 %v790
  %840 = vmatprep.subr.bf16.mxu0 0
  %841 = vmatpush1.bf16.msra.mxu0 %v791
  %842 = vmatprep.subr.bf16.mxu0 0
  %843 = vmatpush1.bf16.msra.mxu0 %v792
  %844 = vmatprep.subr.bf16.mxu0 0
  %845 = vmatpush1.bf16.msra.mxu0 %v793
  %846 = vmatprep.subr.bf16.mxu0 0
  %847 = vmatpush1.bf16.msra.mxu0 %v794
  %848 = vmatprep.subr.bf16.mxu0 0
  %849 = vmatpush1.bf16.msra.mxu0 %v795
  %850 = vmatprep.subr.bf16.mxu0 0
  %851 = vmatpush1.bf16.msra.mxu0 %v796
  %852 = vmatprep.subr.bf16.mxu0 0
  %853 = vmatpush1.bf16.msra.mxu0 %v797
  %854 = vmatprep.subr.bf16.mxu0 0
  %855 = vmatpush1.bf16.msra.mxu0 %v798
  %856 = vmatprep.subr.bf16.mxu0 0
  %857 = vmatpush1.bf16.msra.mxu0 %v799
  %858 = vmatprep.subr.bf16.mxu0 0
  %859 = vmatpush1.bf16.msra.mxu0 %v800
  %860 = vmatprep.subr.bf16.mxu0 0
  %861 = vmatpush1.bf16.msra.mxu0 %v801
  %862 = vmatprep.subr.bf16.mxu0 0
  %863 = vmatpush1.bf16.msra.mxu0 %v802
  %864 = vmatprep.subr.bf16.mxu0 0
  %865 = vmatpush1.bf16.msra.mxu0 %v803
  %866 = vmatprep.subr.bf16.mxu0 0
  %867 = vmatpush1.bf16.msra.mxu0 %v804
  %868 = vmatprep.subr.bf16.mxu0 0
  %869 = vmatpush1.bf16.msra.mxu0 %v805
  %870 = vmatprep.mubr.bf16.mxu0 %v641
  %871 = vmatmul.mubr.bf16.gmra.mrb[0].mxu0 %v640
  %v872 = vpop.f32.mrb[0].mxu0
  %v873 = vadd.f32 0.0, %v872
  %v874 = vpop.f32.mrb[0].mxu0
  %v875 = vpop.f32.mrb[0].mxu0
  %v876 = vadd.f32 0.0, %v875
  %v877 = vpop.f32.mrb[0].mxu0
  %878 = vmatprep.mubr.bf16.mxu0 %v644
  %879 = vmatmul.mubr.bf16.gmra.mrb[0].mxu0 %v643
  %v880 = vpop.f32.mrb[0].mxu0
  %v881 = vadd.f32 0.0, %v880
  %v882 = vpop.f32.mrb[0].mxu0
  %v883 = vpop.f32.mrb[0].mxu0
  %v884 = vadd.f32 0.0, %v883
  %v885 = vpop.f32.mrb[0].mxu0
  %886 = vdwg.mxu0
  %887 = vmatprep.subr.bf16.mxu0 0
  %888 = vmatpush1.bf16.msra.mxu0 %v806
  %889 = vmatprep.subr.bf16.mxu0 0
  %890 = vmatpush1.bf16.msra.mxu0 %v807
  %891 = vmatprep.subr.bf16.mxu0 0
  %892 = vmatpush1.bf16.msra.mxu0 %v808
  %893 = vmatprep.subr.bf16.mxu0 0
  %894 = vmatpush1.bf16.msra.mxu0 %v809
  %895 = vmatprep.subr.bf16.mxu0 0
  %896 = vmatpush1.bf16.msra.mxu0 %v810
  %897 = vmatprep.subr.bf16.mxu0 0
  %898 = vmatpush1.bf16.msra.mxu0 %v811
  %899 = vmatprep.subr.bf16.mxu0 0
  %900 = vmatpush1.bf16.msra.mxu0 %v812
  %901 = vmatprep.subr.bf16.mxu0 0
  %902 = vmatpush1.bf16.msra.mxu0 %v813
  %903 = vmatprep.subr.bf16.mxu0 0
  %904 = vmatpush1.bf16.msra.mxu0 0
  %905 = vmatprep.subr.bf16.mxu0 0
  %906 = vmatpush1.bf16.msra.mxu0 0
  %907 = vmatprep.subr.bf16.mxu0 0
  %908 = vmatpush1.bf16.msra.mxu0 0
  %909 = vmatprep.subr.bf16.mxu0 0
  %910 = vmatpush1.bf16.msra.mxu0 0
  %911 = vmatprep.subr.bf16.mxu0 0
  %912 = vmatpush1.bf16.msra.mxu0 0
  %913 = vmatprep.subr.bf16.mxu0 0
  %914 = vmatpush1.bf16.msra.mxu0 0
  %915 = vmatprep.subr.bf16.mxu0 0
  %916 = vmatpush1.bf16.msra.mxu0 0
  %917 = vmatprep.subr.bf16.mxu0 0
  %918 = vmatpush1.bf16.msra.mxu0 0
  %919 = vmatprep.mubr.bf16.mxu0 0
  %920 = vmatmul.mubr.bf16.gmra.mrb[0].mxu0 %v642
  %v921 = vpop.f32.mrb[0].mxu0
  %v922 = vadd.f32 %v873, %v921
  %v923 = vpop.f32.mrb[0].mxu0
  %v924 = vpop.f32.mrb[0].mxu0
  %v925 = vadd.f32 %v876, %v924
  %v926 = vpop.f32.mrb[0].mxu0
  %927 = vmatprep.mubr.bf16.mxu0 0
  %928 = vmatmul.mubr.bf16.gmra.mrb[0].mxu0 %v645
  %v929 = vpop.f32.mrb[0].mxu0
  %v930 = vadd.f32 %v881, %v929
  %v931 = vpop.f32.mrb[0].mxu0
  %v932 = vpop.f32.mrb[0].mxu0
  %v933 = vadd.f32 %v884, %v932
  %v934 = vpop.f32.mrb[0].mxu0
  %935 = vdwg.mxu0
  %v936 = vld [vmem:[%s4] sm:$0x3]
  %v937 = vadd.f32 %v922, %v925
  %v938 = vadd.f32 %v937, %v930
  %v939 = vadd.f32 %v938, %v933
  %v940 = vrot.slane %v939, 4
  %v941 = vadd.f32 %v939, %v940
  %v942 = vrot.slane %v941, 2
  %v943 = vadd.f32 %v941, %v942
  %v944 = vrot.slane %v943, 1
  %v945 = vadd.f32 %v943, %v944
  %v946 = vmul.f32 %v922, %v922
  %v947 = vmul.f32 %v925, %v925
  %v948 = vmul.f32 %v930, %v930
  %v949 = vmul.f32 %v933, %v933
  %v950 = vadd.f32 %v946, %v947
  %v951 = vadd.f32 %v950, %v948
  %v952 = vadd.f32 %v951, %v949
  %v953 = vrot.slane %v952, 4
  %v954 = vadd.f32 %v952, %v953
  %v955 = vrot.slane %v954, 2
  %v956 = vadd.f32 %v954, %v955
  %v957 = vrot.slane %v956, 1
  %v958 = vadd.f32 %v956, %v957
  %v959 = vsel %vm284, %v945, %v958
  %960 = vmatprep.subr.mxu0 0.0
  %961 = vmatpush1.msra.mxu0 %v260
  %962 = vmatprep.subr.mxu0 0.0
  %963 = vmatpush1.msra.mxu0 %v261
  %964 = vmatprep.subr.mxu0 0.0
  %965 = vmatpush1.msra.mxu0 %v262
  %966 = vmatprep.subr.mxu0 0.0
  %967 = vmatpush1.msra.mxu0 %v263
  %968 = vmatprep.subr.mxu0 0.0
  %969 = vmatpush1.msra.mxu0 %v264
  %970 = vmatprep.subr.mxu0 0.0
  %971 = vmatpush1.msra.mxu0 %v265
  %972 = vmatprep.subr.mxu0 0.0
  %973 = vmatpush1.msra.mxu0 %v266
  %974 = vmatprep.subr.mxu0 0.0
  %975 = vmatpush1.msra.mxu0 %v267
  %976 = vmatprep.subr.mxu0 0.0
  %977 = vmatpush1.msra.mxu0 %v268
  %978 = vmatprep.subr.mxu0 0.0
  %979 = vmatpush1.msra.mxu0 %v269
  %980 = vmatprep.subr.mxu0 0.0
  %981 = vmatpush1.msra.mxu0 %v270
  %982 = vmatprep.subr.mxu0 0.0
  %983 = vmatpush1.msra.mxu0 %v271
  %984 = vmatprep.subr.mxu0 0.0
  %985 = vmatpush1.msra.mxu0 %v272
  %986 = vmatprep.subr.mxu0 0.0
  %987 = vmatpush1.msra.mxu0 %v273
  %988 = vmatprep.subr.mxu0 0.0
  %989 = vmatpush1.msra.mxu0 %v274
  %990 = vmatprep.subr.mxu0 0.0
  %991 = vmatpush1.msra.mxu0 %v275
  %992 = vmatprep.subr.mxu0 0.0
  %993 = vmatpush1.msra.mxu0 0.0
  %994 = vmatprep.subr.mxu0 0.0
  %995 = vmatpush1.msra.mxu0 0.0
  %996 = vmatprep.subr.mxu0 0.0
  %997 = vmatpush1.msra.mxu0 0.0
  %998 = vmatprep.subr.mxu0 0.0
  %999 = vmatpush1.msra.mxu0 0.0
  %1000 = vmatprep.subr.mxu0 0.0
  %1001 = vmatpush1.msra.mxu0 0.0
  %1002 = vmatprep.subr.mxu0 0.0
  %1003 = vmatpush1.msra.mxu0 0.0
  %1004 = vmatprep.subr.mxu0 0.0
  %1005 = vmatpush1.msra.mxu0 0.0
  %1006 = vmatprep.subr.mxu0 0.0
  %1007 = vmatpush1.msra.mxu0 0.0
  %1008 = vmatprep.subr.mxu0 0.0
  %1009 = vmatpush1.msra.mxu0 0.0
  %1010 = vmatprep.subr.mxu0 0.0
  %1011 = vmatpush1.msra.mxu0 0.0
  %1012 = vmatprep.subr.mxu0 0.0
  %1013 = vmatpush1.msra.mxu0 0.0
  %1014 = vmatprep.subr.mxu0 0.0
  %1015 = vmatpush1.msra.mxu0 0.0
  %1016 = vmatprep.subr.mxu0 0.0
  %1017 = vmatpush1.msra.mxu0 0.0
  %1018 = vmatprep.subr.mxu0 0.0
  %1019 = vmatpush1.msra.mxu0 0.0
  %1020 = vmatprep.subr.mxu0 0.0
  %1021 = vmatpush1.msra.mxu0 0.0
  %1022 = vmatprep.subr.mxu0 0.0
  %1023 = vmatpush1.msra.mxu0 0.0
  %1024 = vmatprep.mubr.f32.mxu0 0.0
  %1025 = vmatmul.mubr.f32.gmra.mrb[0].mxu0 %v959
  %v1026 = vpop.f32.mrb[0].mxu0
  %v1027 = vadd.f32 0.0, %v1026
  %v1028 = vpop.f32.mrb[0].mxu0
  %1029 = vdwg.mxu0
  %v1030 = vmul.f32 %v1027, %v1027
  %v1032 = vrot.slane %v1030, 7
  %v1034 = vsub.f32 %v1027, %v1032
  %v1035 = vadd.f32 %v1034, 1e-05
  %v1036 = vrsqrt.pop %v1035
  %v1038 = vrot.slane %v1036, 1
  %v1040 = vmul.f32 %v936, %v1038
  %v1041 = vmul.f32 %v1027, %v1040
  %v1043 = vrot.slane %v1041, 7
  %v1045 = vsub.f32 %v936, %v1043
  %v1046 = vlaneseq
  %v1047 = vshrl.u32 %v1046, 7
  %v1048 = vsub.s32 0, %v1047
  %v1049 = vrot.slane %v1040, %v1048
  %v1050 = vmul.f32 %v922, %v1049
  %v1051 = vmul.f32 %v925, %v1049
  %v1052 = vmul.f32 %v930, %v1049
  %v1053 = vmul.f32 %v933, %v1049
  %v1054 = vlaneseq
  %v1055 = vshrl.u32 %v1054, 7
  %v1056 = vsub.s32 1, %v1055
  %v1057 = vrot.slane %v1045, %v1056
  %v1058 = vadd.f32 %v1050, %v1057
  %v1059 = vadd.f32 %v1051, %v1057
  %v1060 = vadd.f32 %v1052, %v1057
  %v1061 = vadd.f32 %v1053, %v1057
  %v1062 = vmax.f32 %v1058, 0.0
  %v1063 = vmax.f32 %v1059, 0.0
  %v1064 = vmax.f32 %v1060, 0.0
  %v1065 = vmax.f32 %v1061, 0.0
  %1066 = vst [vmem:[%s5] sm:$0xff] %v1062
  %1067 = vst [vmem:[%s5 + $0x8] sm:$0xff] %v1063
  %1068 = vst [vmem:[%s5 + $0x10] sm:$0xff] %v1064
  %1069 = vst [vmem:[%s5 + $0x18] sm:$0xff] %v1065
  // Predicated region
  $region22: #{inconv_forward.1} parent=0 // pred_check
    _
  $region23: #{inconv_forward.1} parent=0 // pred_check_branch
    %1071 = sbr.rel (0) target = $region25
  $region24: #{inconv_forward.1} parent=0 // pred_region
    _
  $region25: #{inconv_forward.1} parent=0 // pred_fallthru
    _
  // Predicated region
  $region26: #{inconv_forward.1} parent=0 // pred_check
    _
  $region27: #{inconv_forward.1} parent=0 // pred_check_branch
    %1073 = sbr.rel (0) target = $region29
  $region28: #{inconv_forward.1} parent=0 // pred_region
    _
  $region29: #{inconv_forward.1} parent=0 // pred_fallthru
    _

</llo_original>
